<compile_context>
chip_gen: v7x
topology: tpu7x:2x2x1
jax: 0.10.0
libtpu: 0.0.40
codegen_flags: <defaults>
</compile_context>

<pallas_src>
import functools

import jax
import jax.numpy as jnp
from jax.experimental import pallas as pl
from jax.experimental.pallas import tpu as pltpu


def _round_up(x, m):
    return ((x + m - 1) // m) * m


def _vmem_budget_and_limit():
    """Generation-aware VMEM budget (v7x: 64 MiB/TC, v5e/v6e: 128 MiB)."""
    try:
        cap = int(pltpu.get_tpu_info().vmem_capacity_bytes)
        if cap <= 0:
            raise ValueError("bad vmem capacity")
    except Exception:
        cap = 64 * 1024 * 1024          # conservative fallback (v7x per-TC VMEM)
    budget = (cap * 3) // 4             # ~48 MiB on v7x, ~96 MiB on v5e/v6e
    limit = min(cap - (2 << 20), budget + (4 << 20))
    return budget, max(int(limit), 32 << 20)


def _pick_batch_tile(B, S, Dq, Dk, Dv, H, Npad, Wpad, in_itemsize, mxu_itemsize,
                     budget_bytes, min_steps=2):
    """Largest legal batch tile whose blocks AND f32 intermediates fit VMEM.

    Legal tiles keep the 2-D BlockSpecs aligned (TB == B or TB % 8 == 0, TB | B).
    Prefers >= `min_steps` grid steps so the "parallel" batch axis can be
    sharded across v7x's two TensorCores.  If nothing fits the budget, returns
    the smallest legal tile (never silently TB=B).
    """
    Spad = _round_up(S, 128)
    nbuf = 2                                            # Pallas double-buffers blocks
    per_row = (
        nbuf * in_itemsize * (Dq + S * (Dk + Dv))       # q/k/v input blocks
        + nbuf * 4 * Wpad                               # output block
        + 4 * (Npad + S * Npad + H * Npad)              # f32 q_all, k_all, q_heads
        + 4 * 3 * H * Spad                              # f32 scores / exp / probs
        + 4 * 2 * Wpad                                  # f32 out_heads + padded store temp
        + mxu_itemsize * (S * Dk + S * Dv + H * Spad)   # MXU-operand casts
    )
    fixed = (
        2 * mxu_itemsize * Npad * (Dq + Dk)             # resident projection weights
        + 2 * 4 * 2 * Npad + 4 * H * Npad               # biases + head mask
        + (2 << 20)                                     # compiler scratch slack
    )
    cands = sorted({d for d in range(1, B + 1)
                    if B % d == 0 and (d == B or d % 8 == 0)}, reverse=True)

    def fits(tb):
        return fixed + tb * per_row <= budget_bytes

    for tb in cands:                                    # largest that fits with >=2 steps
        if fits(tb) and (B // tb) >= min_steps:
            return tb
    for tb in cands:                                    # otherwise largest that fits
        if fits(tb):
            return tb
    return cands[-1]                                    # nothing fits: smallest legal tile


def _attention_kernel(q_ref, k_ref, v_ref, wq_ref, bq_ref, wk_ref, bk_ref, o_ref,
                      *, n_heads, key_dim, mxu_dtype):
    # q_ref : (TB, Dq)            queries (batch tile)
    # k_ref : (TB, S, Dk)         keys
    # v_ref : (TB, S, Dv)         values
    # wq_ref: (Dq, Npad), bq_ref: (1, Npad)   heads folded, lane-padded
    # wk_ref: (Dk, Npad), bk_ref: (1, Npad)
    # o_ref : (TB, Wpad)          lane-dense head-major output (zero padded)
    TB = q_ref.shape[0]
    S, Dk = k_ref.shape[1], k_ref.shape[2]
    Dv = v_ref.shape[2]
    H, Kd = n_heads, key_dim
    Npad = wq_ref.shape[1]
    f32 = jnp.float32

    # --- Projections: one MXU matmul each, all heads folded (f32 accumulation). ---
    q_all = jnp.dot(q_ref[...].astype(mxu_dtype), wq_ref[...],
                    preferred_element_type=f32) + bq_ref[...].astype(f32)     # (TB, Npad)

    k_flat = k_ref[...].reshape(TB * S, Dk).astype(mxu_dtype)
    k_all = jnp.dot(k_flat, wk_ref[...],
                    preferred_element_type=f32) + bk_ref[...].astype(f32)     # (TB*S, Npad)
    k_all = k_all.reshape(TB, S, Npad)

    # --- Head-masked query so the score reduction runs on the MXU, not the XLU. ---
    lane = jax.lax.broadcasted_iota(jnp.int32, (H, Npad), 1)
    head = jax.lax.broadcasted_iota(jnp.int32, (H, Npad), 0)
    head_mask = ((lane >= head * Kd) & (lane < (head + 1) * Kd)).astype(f32)  # (H, Npad)
    q_heads = q_all[:, None, :] * head_mask[None, :, :]                       # (TB, H, Npad)

    # --- Scores for all heads: one batched MXU contraction over the padded lanes. ---
    scale = 1.0 / jnp.sqrt(jnp.float32(Kd))
    scores = jnp.einsum("bhn,bsn->bhs", q_heads, k_all,
                        preferred_element_type=f32) * scale                   # (TB, H, S)

    # --- Stable softmax over the key axis (== F.softmax(weight, dim=2)). ---
    scores = scores - jnp.max(scores, axis=-1, keepdims=True)
    e = jnp.exp(scores)
    denom = jnp.sum(e, axis=-1, keepdims=True)
    inv = pl.reciprocal(denom, approx=True)        # EUP vrcp
    inv = inv * (2.0 - denom * inv)                # one Newton step -> ~f32 accuracy
    p = e * inv                                                               # (TB, H, S)

    # --- Weighted value sum for all heads: one batched MXU contraction over S. ---
    out_heads = jnp.einsum("bhs,bsv->bhv",
                           p.astype(mxu_dtype), v_ref[...].astype(mxu_dtype),
                           preferred_element_type=f32)                        # (TB, H, Dv)

    # --- Lane-dense, head-major store (== th.cat(attns, dim=1)), zero padded. ---
    parts = [out_heads[:, h, :] for h in range(H)]
    pad_cols = o_ref.shape[1] - H * Dv
    if pad_cols:
        parts.append(jnp.zeros((TB, pad_cols), f32))
    o_ref[...] = jnp.concatenate(parts, axis=-1).astype(o_ref.dtype)


@functools.partial(jax.jit, static_argnames=("use_bf16_mxu",))
def attention_forward(queries, keys, values, wq, bq, wk, bk, use_bf16_mxu=True):
    """Pallas equivalent of Attention.forward.

    queries: (B, Dq); keys: (B, S, Dk); values: (B, S, Dv)
    wq: (H, Dq, Kd)   (per-head `x @ w + b` layout, i.e. nn.Linear weight^T)
    bq: (H, Kd); wk: (H, Dk, Kd); bk: (H, Kd)
    returns: (B, H * Dv)  == th.cat(attns, dim=1)
    """
    H, Dq, Kd = wq.shape
    B, S, Dk = keys.shape
    Dv = values.shape[-1]

    mxu_dtype = jnp.bfloat16 if use_bf16_mxu else jnp.float32

    # Fold heads into the projection weights: column h*Kd + j <-> (head h, feat j),
    # lane-padded to a multiple of 128 (padding columns are masked out in-kernel).
    N = H * Kd
    Npad = _round_up(N, 128)
    wq_flat = jnp.transpose(wq, (1, 0, 2)).reshape(Dq, N)
    wk_flat = jnp.transpose(wk, (1, 0, 2)).reshape(Dk, N)
    bq_flat = bq.reshape(1, N).astype(jnp.float32)
    bk_flat = bk.reshape(1, N).astype(jnp.float32)
    if Npad != N:
        pad = ((0, 0), (0, Npad - N))
        wq_flat = jnp.pad(wq_flat, pad)
        wk_flat = jnp.pad(wk_flat, pad)
        bq_flat = jnp.pad(bq_flat, pad)
        bk_flat = jnp.pad(bk_flat, pad)
    wq_flat = wq_flat.astype(mxu_dtype)        # bf16 MXU operands, f32 accumulation
    wk_flat = wk_flat.astype(mxu_dtype)

    # Lane-dense output slab (padded to 128 lanes; sliced back below).
    Wout = H * Dv
    Wpad = _round_up(Wout, 128)

    in_itemsize = jnp.dtype(keys.dtype).itemsize
    mxu_itemsize = jnp.dtype(mxu_dtype).itemsize
    budget, vmem_limit = _vmem_budget_and_limit()
    TB = _pick_batch_tile(B, S, Dq, Dk, Dv, H, Npad, Wpad,
                          in_itemsize, mxu_itemsize, budget, min_steps=2)
    steps = B // TB

    # Advisory cost estimate: padded weights, per-step weight re-fetch, f32 output.
    weight_bytes = mxu_itemsize * Npad * (Dq + Dk) + 4 * 2 * Npad
    bytes_accessed = (in_itemsize * (queries.size + keys.size + values.size)
                      + steps * weight_bytes + 4 * B * Wpad)
    flops = (2 * B * Dq * Npad            # query projection
             + 2 * B * S * Dk * Npad      # key projection
             + 2 * B * H * Npad * S       # scores
             + 2 * B * H * S * Dv)        # weighted value sum

    kernel = functools.partial(_attention_kernel, n_heads=H, key_dim=Kd,
                               mxu_dtype=mxu_dtype)

    out = pl.pallas_call(
        kernel,
        out_shape=jax.ShapeDtypeStruct((B, Wpad), jnp.float32),
        grid=(steps,),
        in_specs=[
            pl.BlockSpec((TB, Dq), lambda b: (b, 0)),
            pl.BlockSpec((TB, S, Dk), lambda b: (b, 0, 0)),
            pl.BlockSpec((TB, S, Dv), lambda b: (b, 0, 0)),
            pl.BlockSpec((Dq, Npad), lambda b: (0, 0)),
            pl.BlockSpec((1, Npad), lambda b: (0, 0)),
            pl.BlockSpec((Dk, Npad), lambda b: (0, 0)),
            pl.BlockSpec((1, Npad), lambda b: (0, 0)),
        ],
        out_specs=pl.BlockSpec((TB, Wpad), lambda b: (b, 0)),
        compiler_params=pltpu.CompilerParams(
            dimension_semantics=("parallel",),
            vmem_limit_bytes=int(vmem_limit)),
        cost_estimate=pl.CostEstimate(
            flops=int(flops),
            transcendentals=B * H * S + B * H,
            bytes_accessed=int(bytes_accessed)),
    )(queries, keys, values, wq_flat, bq_flat, wk_flat, bk_flat)

    return out if Wpad == Wout else out[:, :Wout]


def _reference_forward(queries, keys, values, wq, bq, wk, bk):
    """Pure-JAX reference mirroring the PyTorch forward."""
    H, _, Kd = wq.shape
    outs = []
    for h in range(H):
        q = queries @ wq[h] + bq[h]                          # (B, Kd)
        k = jnp.einsum("bsd,dk->bsk", keys, wk[h]) + bk[h]   # (B, S, Kd)
        w = jnp.einsum("bk,bsk->bs", q, k) / jnp.sqrt(jnp.float32(Kd))
        p = jax.nn.softmax(w, axis=-1)
        outs.append(jnp.einsum("bs,bsv->bv", p, values))
    return jnp.concatenate(outs, axis=1)


if __name__ == "__main__":
    # Small shapes consistent with the module's forward signature.
    B = 2            # batch
    S = 8            # "?" sequence length of keys / values
    query_input_dim = 32
    key_input_dim = 32
    key_dim = 32
    value_dim = 16
    n_heads = 2

    key = jax.random.PRNGKey(0)
    kq, kk, kv, kwq, kbq, kwk, kbk = jax.random.split(key, 7)

    queries = jax.random.normal(kq, (B, query_input_dim), jnp.float32)
    keys = jax.random.normal(kk, (B, S, key_input_dim), jnp.float32)
    values = jax.random.normal(kv, (B, S, value_dim), jnp.float32)

    # Deterministic parameter init (uniform, roughly like nn.Linear's default).
    def uinit(k, shape, fan_in):
        bound = 1.0 / jnp.sqrt(jnp.float32(fan_in))
        return jax.random.uniform(k, shape, jnp.float32, -bound, bound)

    wq = uinit(kwq, (n_heads, query_input_dim, key_dim), query_input_dim)
    bq = uinit(kbq, (n_heads, key_dim), query_input_dim)
    wk = uinit(kwk, (n_heads, key_input_dim, key_dim), key_input_dim)
    bk = uinit(kbk, (n_heads, key_dim), key_input_dim)

    ref = _reference_forward(queries, keys, values, wq, bq, wk, bk)

    # Exact-semantics path: f32 MXU operands.
    out_f32 = jax.block_until_ready(
        attention_forward(queries, keys, values, wq, bq, wk, bk,
                          use_bf16_mxu=False))
    assert out_f32.shape == (B, n_heads * value_dim), out_f32.shape
    assert jnp.allclose(out_f32, ref, atol=5e-4, rtol=5e-4), "f32 kernel mismatch"

    # Default performance path: bf16 MXU operands, f32 accumulation.
    out_bf16 = jax.block_until_ready(
        attention_forward(queries, keys, values, wq, bq, wk, bk))
    assert out_bf16.shape == (B, n_heads * value_dim), out_bf16.shape
    assert jnp.allclose(out_bf16, ref, atol=2e-2, rtol=2e-2), "bf16 kernel mismatch"

    print("KERNEL_OK")
</pallas_src>

<mosaic_0001>
module attributes {stable_mosaic.version = 11 : i64} {
  func.func @_attention_kernel(%arg0: i32, %arg1: memref<2x32xf32, #tpu.memory_space<vmem>>, %arg2: memref<2x8x32xf32, #tpu.memory_space<vmem>>, %arg3: memref<2x8x16xf32, #tpu.memory_space<vmem>>, %arg4: memref<32x128xf32, #tpu.memory_space<vmem>>, %arg5: memref<1x128xf32, #tpu.memory_space<vmem>>, %arg6: memref<32x128xf32, #tpu.memory_space<vmem>>, %arg7: memref<1x128xf32, #tpu.memory_space<vmem>>, %arg8: memref<2x128xf32, #tpu.memory_space<vmem>>) attributes {dimension_semantics = [#tpu.dimension_semantics<parallel>], iteration_bounds = array<i64: 1>, scalar_prefetch = 0 : i64, scratch_operands = 0 : i64, tpu.core_type = #tpu.core_type<tc>, window_params = [{transform_indices = @transform_0, window_bounds = array<i64: 2, 32>}, {transform_indices = @transform_1, window_bounds = array<i64: 2, 8, 32>}, {transform_indices = @transform_2, window_bounds = array<i64: 2, 8, 16>}, {pipeline_mode = #tpu.pipeline_mode<synchronous>, transform_indices = @transform_3, window_bounds = array<i64: 32, 128>}, {pipeline_mode = #tpu.pipeline_mode<synchronous>, transform_indices = @transform_4, window_bounds = array<i64: 1, 128>}, {pipeline_mode = #tpu.pipeline_mode<synchronous>, transform_indices = @transform_5, window_bounds = array<i64: 32, 128>}, {pipeline_mode = #tpu.pipeline_mode<synchronous>, transform_indices = @transform_6, window_bounds = array<i64: 1, 128>}, {transform_indices = @transform_7, window_bounds = array<i64: 2, 128>}]} {
    %c0 = arith.constant 0 : index
    %c0_0 = arith.constant 0 : index
    %0 = vector.load %arg1[%c0, %c0_0] : memref<2x32xf32, #tpu.memory_space<vmem>>, vector<2x32xf32>
    %c0_1 = arith.constant 0 : index
    %c0_2 = arith.constant 0 : index
    %1 = vector.load %arg4[%c0_1, %c0_2] : memref<32x128xf32, #tpu.memory_space<vmem>>, vector<32x128xf32>
    %cst = arith.constant dense<0.000000e+00> : vector<2x128xf32>
    %2 = tpu.matmul %0, %1, %cst {dimension_numbers = #tpu.dot_dimension_numbers<[1], [0], [0], [1], [0, 0, 1, 1], [], []>} : vector<2x32xf32>, vector<32x128xf32>, vector<2x128xf32> -> vector<2x128xf32>
    %c0_3 = arith.constant 0 : index
    %c0_4 = arith.constant 0 : index
    %3 = vector.load %arg5[%c0_3, %c0_4] : memref<1x128xf32, #tpu.memory_space<vmem>>, vector<1x128xf32>
    %4 = vector.broadcast %3 : vector<1x128xf32> to vector<2x128xf32>
    %5 = arith.addf %2, %4 : vector<2x128xf32>
    %c0_5 = arith.constant 0 : index
    %c0_6 = arith.constant 0 : index
    %c0_7 = arith.constant 0 : index
    %6 = vector.load %arg2[%c0_5, %c0_6, %c0_7] : memref<2x8x32xf32, #tpu.memory_space<vmem>>, vector<2x8x32xf32>
    %7 = vector.shape_cast %6 : vector<2x8x32xf32> to vector<16x32xf32>
    %c0_8 = arith.constant 0 : index
    %c0_9 = arith.constant 0 : index
    %8 = vector.load %arg6[%c0_8, %c0_9] : memref<32x128xf32, #tpu.memory_space<vmem>>, vector<32x128xf32>
    %cst_10 = arith.constant dense<0.000000e+00> : vector<16x128xf32>
    %9 = tpu.matmul %7, %8, %cst_10 {dimension_numbers = #tpu.dot_dimension_numbers<[1], [0], [0], [1], [0, 0, 1, 1], [], []>} : vector<16x32xf32>, vector<32x128xf32>, vector<16x128xf32> -> vector<16x128xf32>
    %c0_11 = arith.constant 0 : index
    %c0_12 = arith.constant 0 : index
    %10 = vector.load %arg7[%c0_11, %c0_12] : memref<1x128xf32, #tpu.memory_space<vmem>>, vector<1x128xf32>
    %11 = vector.broadcast %10 : vector<1x128xf32> to vector<16x128xf32>
    %12 = arith.addf %9, %11 : vector<16x128xf32>
    %13 = vector.shape_cast %12 : vector<16x128xf32> to vector<2x8x128xf32>
    %14 = tpu.iota {dimensions = array<i32: 1>} : vector<2x128xi32>
    %15 = tpu.iota {dimensions = array<i32: 0>} : vector<2x128xi32>
    %c32_i32 = arith.constant 32 : i32
    %16 = vector.broadcast %c32_i32 : i32 to vector<2x128xi32>
    %17 = arith.muli %15, %16 : vector<2x128xi32>
    %18 = arith.cmpi sge, %14, %17 : vector<2x128xi32>
    %c1_i32 = arith.constant 1 : i32
    %19 = vector.broadcast %c1_i32 : i32 to vector<2x128xi32>
    %20 = arith.addi %15, %19 : vector<2x128xi32>
    %c32_i32_13 = arith.constant 32 : i32
    %21 = vector.broadcast %c32_i32_13 : i32 to vector<2x128xi32>
    %22 = arith.muli %20, %21 : vector<2x128xi32>
    %23 = arith.cmpi slt, %14, %22 : vector<2x128xi32>
    %24 = arith.andi %18, %23 : vector<2x128xi1>
    %25 = arith.extui %24 : vector<2x128xi1> to vector<2x128xi32>
    %26 = arith.sitofp %25 : vector<2x128xi32> to vector<2x128xf32>
    %27 = vector.shape_cast %5 : vector<2x128xf32> to vector<2x1x128xf32>
    %28 = vector.shape_cast %26 : vector<2x128xf32> to vector<1x2x128xf32>
    %29 = vector.broadcast %27 : vector<2x1x128xf32> to vector<2x2x128xf32>
    %30 = vector.broadcast %28 : vector<1x2x128xf32> to vector<2x2x128xf32>
    %31 = arith.mulf %29, %30 : vector<2x2x128xf32>
    %cst_14 = arith.constant 3.200000e+01 : f32
    %32 = math.sqrt %cst_14 : f32
    %cst_15 = arith.constant 1.000000e+00 : f32
    %33 = arith.divf %cst_15, %32 : f32
    "tpu.trace_start"() <{level = 10 : i32, message = "bhn,bsn->bhs"}> : () -> ()
    %cst_16 = arith.constant dense<0.000000e+00> : vector<2x2x8xf32>
    %34 = tpu.matmul %31, %13, %cst_16 {dimension_numbers = #tpu.dot_dimension_numbers<[2], [2], [1], [1], [0, 0, 0, 1, 1, 1], [0], [0]>} : vector<2x2x128xf32>, vector<2x8x128xf32>, vector<2x2x8xf32> -> vector<2x2x8xf32>
    "tpu.trace_stop"() : () -> ()
    %35 = vector.broadcast %33 : f32 to vector<2x2x8xf32>
    %36 = arith.mulf %34, %35 : vector<2x2x8xf32>
    %cst_17 = arith.constant dense<0xFF800000> : vector<2x2xf32>
    %37 = vector.multi_reduction <maximumf>, %36, %cst_17 [2] : vector<2x2x8xf32> to vector<2x2xf32>
    %38 = vector.shape_cast %37 : vector<2x2xf32> to vector<2x2x1xf32>
    %39 = vector.broadcast %38 : vector<2x2x1xf32> to vector<2x2x8xf32>
    %40 = arith.subf %36, %39 : vector<2x2x8xf32>
    %41 = math.exp %40 : vector<2x2x8xf32>
    %cst_18 = arith.constant dense<0.000000e+00> : vector<2x2xf32>
    %42 = vector.multi_reduction <add>, %41, %cst_18 [2] : vector<2x2x8xf32> to vector<2x2xf32>
    %43 = vector.shape_cast %42 : vector<2x2xf32> to vector<2x2x1xf32>
    %44 = tpu.reciprocal %43 {approx = true} : vector<2x2x1xf32> -> vector<2x2x1xf32>
    %45 = arith.mulf %43, %44 : vector<2x2x1xf32>
    %cst_19 = arith.constant 2.000000e+00 : f32
    %46 = vector.broadcast %cst_19 : f32 to vector<2x2x1xf32>
    %47 = arith.subf %46, %45 : vector<2x2x1xf32>
    %48 = arith.mulf %44, %47 : vector<2x2x1xf32>
    %49 = vector.broadcast %48 : vector<2x2x1xf32> to vector<2x2x8xf32>
    %50 = arith.mulf %41, %49 : vector<2x2x8xf32>
    %c0_20 = arith.constant 0 : index
    %c0_21 = arith.constant 0 : index
    %c0_22 = arith.constant 0 : index
    %51 = vector.load %arg3[%c0_20, %c0_21, %c0_22] : memref<2x8x16xf32, #tpu.memory_space<vmem>>, vector<2x8x16xf32>
    "tpu.trace_start"() <{level = 10 : i32, message = "bhs,bsv->bhv"}> : () -> ()
    %cst_23 = arith.constant dense<0.000000e+00> : vector<2x2x16xf32>
    %52 = tpu.matmul %50, %51, %cst_23 {dimension_numbers = #tpu.dot_dimension_numbers<[2], [1], [1], [2], [0, 0, 0, 1, 1, 2], [0], [0]>} : vector<2x2x8xf32>, vector<2x8x16xf32>, vector<2x2x16xf32> -> vector<2x2x16xf32>
    "tpu.trace_stop"() : () -> ()
    %53 = vector.extract_strided_slice %52 {offsets = [0, 0, 0], sizes = [2, 1, 16], strides = [1, 1, 1]} : vector<2x2x16xf32> to vector<2x1x16xf32>
    %54 = vector.shape_cast %53 : vector<2x1x16xf32> to vector<2x16xf32>
    %55 = vector.extract_strided_slice %52 {offsets = [0, 1, 0], sizes = [2, 1, 16], strides = [1, 1, 1]} : vector<2x2x16xf32> to vector<2x1x16xf32>
    %56 = vector.shape_cast %55 : vector<2x1x16xf32> to vector<2x16xf32>
    %cst_24 = arith.constant 0.000000e+00 : f32
    %57 = vector.broadcast %cst_24 : f32 to vector<2x96xf32>
    %58 = tpu.concatenate %54, %56, %57 in 1 : vector<2x16xf32>, vector<2x16xf32>, vector<2x96xf32> -> vector<2x128xf32>
    %c0_25 = arith.constant 0 : index
    %c0_26 = arith.constant 0 : index
    %59 = vector.load %arg8[%c0_25, %c0_26] : memref<2x128xf32, #tpu.memory_space<vmem>>, vector<2x128xf32>
    tpu.vector_store %arg8[%c0_25, %c0_26], %58 {strides = array<i32>} : memref<2x128xf32, #tpu.memory_space<vmem>>, vector<2x128xf32>,
    return
  }
  func.func @transform_0(%arg0: i32) -> (i32, i32) {
    %c0_i32 = arith.constant 0 : i32
    %c0_i32_0 = arith.constant 0 : i32
    return %arg0, %c0_i32 : i32, i32
  }
  func.func @transform_1(%arg0: i32) -> (i32, i32, i32) {
    %c0_i32 = arith.constant 0 : i32
    %c0_i32_0 = arith.constant 0 : i32
    %c0_i32_1 = arith.constant 0 : i32
    return %arg0, %c0_i32, %c0_i32_0 : i32, i32, i32
  }
  func.func @transform_2(%arg0: i32) -> (i32, i32, i32) {
    %c0_i32 = arith.constant 0 : i32
    %c0_i32_0 = arith.constant 0 : i32
    %c0_i32_1 = arith.constant 0 : i32
    return %arg0, %c0_i32, %c0_i32_0 : i32, i32, i32
  }
  func.func @transform_3(%arg0: i32) -> (i32, i32) {
    %c0_i32 = arith.constant 0 : i32
    %c0_i32_0 = arith.constant 0 : i32
    %c0_i32_1 = arith.constant 0 : i32
    return %c0_i32, %c0_i32_0 : i32, i32
  }
  func.func @transform_4(%arg0: i32) -> (i32, i32) {
    %c0_i32 = arith.constant 0 : i32
    %c0_i32_0 = arith.constant 0 : i32
    %c0_i32_1 = arith.constant 0 : i32
    return %c0_i32, %c0_i32_0 : i32, i32
  }
  func.func @transform_5(%arg0: i32) -> (i32, i32) {
    %c0_i32 = arith.constant 0 : i32
    %c0_i32_0 = arith.constant 0 : i32
    %c0_i32_1 = arith.constant 0 : i32
    return %c0_i32, %c0_i32_0 : i32, i32
  }
  func.func @transform_6(%arg0: i32) -> (i32, i32) {
    %c0_i32 = arith.constant 0 : i32
    %c0_i32_0 = arith.constant 0 : i32
    %c0_i32_1 = arith.constant 0 : i32
    return %c0_i32, %c0_i32_0 : i32, i32
  }
  func.func @transform_7(%arg0: i32) -> (i32, i32) {
    %c0_i32 = arith.constant 0 : i32
    %c0_i32_0 = arith.constant 0 : i32
    return %arg0, %c0_i32 : i32, i32
  }
}

</mosaic_0001>

<llo_original>
// kernel: attention_forward.1
$region0: #{attention_forward.1}
  #allocation0 [shape = 'u32[]', space=smem, size = 0x4, offset = 0x4, fixed_abs, tag = 'smem constant byte address 0x4 - core index']
  #allocation1 [shape = 'u32[144,128]{1,0:T(1,128)}', space=vmem, size = 0x12000, scoped, tag = 'internal scratch']
  %s0 = inlined_call_operand.vmem [shape: f32[2,32], index: 0, kind: input, shape index: {}]
  %s1 = inlined_call_operand.vmem [shape: f32[2,8,32], index: 1, kind: input, shape index: {}]
  %s2 = inlined_call_operand.vmem [shape: f32[2,8,16], index: 2, kind: input, shape index: {}]
  %s3 = inlined_call_operand.vmem [shape: f32[32,128], index: 3, kind: input, shape index: {}]
  %s4 = inlined_call_operand.vmem [shape: f32[1,128], index: 4, kind: input, shape index: {}]
  %s5 = inlined_call_operand.vmem [shape: f32[32,128], index: 5, kind: input, shape index: {}]
  %s6 = inlined_call_operand.vmem [shape: f32[1,128], index: 6, kind: input, shape index: {}]
  %s7 = inlined_call_operand.hbm [shape: f32[2,128], index: 7, kind: output, shape index: {}]
  %s8 = sld [smem:[#allocation0]]
  $region38: #{attention_forward.1} parent=0
    _
  %s10 = ssub.s32 1, %s8
  %s11 = scalar_select 0, %s10, %s8
  $region1: #{attention_forward.1} parent=0
    #allocation2 [shape = 'u8[1024]{0}', space=vmem, size = 0x400, scoped, tag = 'output window, operand 0, single buffered']
    #allocation3 [shape = 's32[1]{0}', space=sflag, size = 0x4, scoped, tag = 'scoped memory for attention_forward.1']
    %12 = vsyncpa [#allocation3], 0
    // Predicated region
    $region2: #{attention_forward.1} parent=1 // pred_check
      _
    $region3: #{attention_forward.1} parent=1 // pred_check_branch
      %14 = sbr.rel (0) target = $region5
    $region4: #{attention_forward.1} parent=1 // pred_region
      _
    $region5: #{attention_forward.1} parent=1 // pred_fallthru
      _
    // Predicated region
    $region6: #{attention_forward.1} parent=1 // pred_check
      _
    $region7: #{attention_forward.1} parent=1 // pred_check_branch
      %16 = sbr.rel (0) target = $region9
    $region8: #{attention_forward.1} parent=1 // pred_region
      _
    $region9: #{attention_forward.1} parent=1 // pred_fallthru
      _
    // Predicated region
    $region10: #{attention_forward.1} parent=1 // pred_check
      _
    $region11: #{attention_forward.1} parent=1 // pred_check_branch
      %18 = sbr.rel (0) target = $region13
    $region12: #{attention_forward.1} parent=1 // pred_region
      _
    $region13: #{attention_forward.1} parent=1 // pred_fallthru
      _
    // Predicated region
    $region14: #{attention_forward.1} parent=1 // pred_check
      _
    $region15: #{attention_forward.1} parent=1 // pred_check_branch
      %20 = sbr.rel (0) target = $region17
    $region16: #{attention_forward.1} parent=1 // pred_region
      _
    $region17: #{attention_forward.1} parent=1 // pred_fallthru
      _
    // Predicated region
    $region18: #{attention_forward.1} parent=1 // pred_check
      _
    $region19: #{attention_forward.1} parent=1 // pred_check_branch
      %22 = sbr.rel (0) target = $region21
    $region20: #{attention_forward.1} parent=1 // pred_region
      _
    $region21: #{attention_forward.1} parent=1 // pred_fallthru
      _
    // Predicated region
    $region22: #{attention_forward.1} parent=1 // pred_check
      _
    $region23: #{attention_forward.1} parent=1 // pred_check_branch
      %24 = sbr.rel (0) target = $region25
    $region24: #{attention_forward.1} parent=1 // pred_region
      _
    $region25: #{attention_forward.1} parent=1 // pred_fallthru
      _
    // Predicated region
    $region26: #{attention_forward.1} parent=1 // pred_check
      _
    $region27: #{attention_forward.1} parent=1 // pred_check_branch
      %26 = sbr.rel (0) target = $region29
    $region28: #{attention_forward.1} parent=1 // pred_region
      _
    $region29: #{attention_forward.1} parent=1 // pred_fallthru
      _
    %v27 = vld [vmem:[%s0] sm:$0x3]
    %v28 = vld [vmem:[%s3] sm:$0xff]
    %v29 = vld [vmem:[%s3 + $0x8] sm:$0xff]
    %v30 = vld [vmem:[%s3 + $0x10] sm:$0xff]
    %v31 = vld [vmem:[%s3 + $0x18] sm:$0xff]
    %v32 = vld [vmem:[%s4] sm:$0x1]
    %v34 = vlaneseq
    %v35 = vshrl.u32 %v34, 7
    %v36 = vsub.s32 0, %v35
    %v37 = vrot.slane %v32, %v36
    %vm39 = vcmask 261120
    %v41 = vsel %vm39, %v27, 0
    %43 = vmatprep.subr.mxu0 0.0
    %44 = vmatpush1.msra.mxu0 %v28
    %45 = vmatprep.subr.mxu0 0.0
    %46 = vmatpush1.msra.mxu0 %v29
    %47 = vmatprep.subr.mxu0 0.0
    %48 = vmatpush1.msra.mxu0 %v30
    %49 = vmatprep.subr.mxu0 0.0
    %50 = vmatpush1.msra.mxu0 %v31
    %51 = vmatprep.subr.mxu0 0.0
    %52 = vmatpush1.msra.mxu0 0.0
    %53 = vmatprep.subr.mxu0 0.0
    %54 = vmatpush1.msra.mxu0 0.0
    %55 = vmatprep.subr.mxu0 0.0
    %56 = vmatpush1.msra.mxu0 0.0
    %57 = vmatprep.subr.mxu0 0.0
    %58 = vmatpush1.msra.mxu0 0.0
    %59 = vmatprep.subr.mxu0 0.0
    %60 = vmatpush1.msra.mxu0 0.0
    %61 = vmatprep.subr.mxu0 0.0
    %62 = vmatpush1.msra.mxu0 0.0
    %63 = vmatprep.subr.mxu0 0.0
    %64 = vmatpush1.msra.mxu0 0.0
    %65 = vmatprep.subr.mxu0 0.0
    %66 = vmatpush1.msra.mxu0 0.0
    %67 = vmatprep.subr.mxu0 0.0
    %68 = vmatpush1.msra.mxu0 0.0
    %69 = vmatprep.subr.mxu0 0.0
    %70 = vmatpush1.msra.mxu0 0.0
    %71 = vmatprep.subr.mxu0 0.0
    %72 = vmatpush1.msra.mxu0 0.0
    %73 = vmatprep.subr.mxu0 0.0
    %74 = vmatpush1.msra.mxu0 0.0
    %75 = vmatprep.subr.mxu0 0.0
    %76 = vmatpush1.msra.mxu0 0.0
    %77 = vmatprep.subr.mxu0 0.0
    %78 = vmatpush1.msra.mxu0 0.0
    %79 = vmatprep.subr.mxu0 0.0
    %80 = vmatpush1.msra.mxu0 0.0
    %81 = vmatprep.subr.mxu0 0.0
    %82 = vmatpush1.msra.mxu0 0.0
    %83 = vmatprep.subr.mxu0 0.0
    %84 = vmatpush1.msra.mxu0 0.0
    %85 = vmatprep.subr.mxu0 0.0
    %86 = vmatpush1.msra.mxu0 0.0
    %87 = vmatprep.subr.mxu0 0.0
    %88 = vmatpush1.msra.mxu0 0.0
    %89 = vmatprep.subr.mxu0 0.0
    %90 = vmatpush1.msra.mxu0 0.0
    %91 = vmatprep.subr.mxu0 0.0
    %92 = vmatpush1.msra.mxu0 0.0
    %93 = vmatprep.subr.mxu0 0.0
    %94 = vmatpush1.msra.mxu0 0.0
    %95 = vmatprep.subr.mxu0 0.0
    %96 = vmatpush1.msra.mxu0 0.0
    %97 = vmatprep.subr.mxu0 0.0
    %98 = vmatpush1.msra.mxu0 0.0
    %99 = vmatprep.subr.mxu0 0.0
    %100 = vmatpush1.msra.mxu0 0.0
    %101 = vmatprep.subr.mxu0 0.0
    %102 = vmatpush1.msra.mxu0 0.0
    %103 = vmatprep.subr.mxu0 0.0
    %104 = vmatpush1.msra.mxu0 0.0
    %105 = vmatprep.subr.mxu0 0.0
    %106 = vmatpush1.msra.mxu0 0.0
    %107 = vmatprep.mubr.f32.mxu0 0.0
    %108 = vmatmul.mubr.f32.gmra.mrb[0].mxu0 %v41
    %v109 = vpop.f32.mrb[0].mxu0
    %v110 = vadd.f32 %v37, %v109
    %v111 = vpop.f32.mrb[0].mxu0
    %112 = vdwg.mxu0
    %v113 = vld [vmem:[%s1] sm:$0xff]
    %v114 = vld [vmem:[%s1 + $0x8] sm:$0xff]
    %v115 = vld [vmem:[%s5] sm:$0xff]
    %v116 = vld [vmem:[%s5 + $0x8] sm:$0xff]
    %v117 = vld [vmem:[%s5 + $0x10] sm:$0xff]
    %v118 = vld [vmem:[%s5 + $0x18] sm:$0xff]
    %v119 = vld [vmem:[%s6] sm:$0x1]
    %v121 = vlaneseq
    %v122 = vshrl.u32 %v121, 7
    %v123 = vsub.s32 0, %v122
    %v124 = vrot.slane %v119, %v123
    %v127 = vsel %vm39, %v113, 0
    %v130 = vsel %vm39, %v114, 0
    %132 = vmatprep.subr.mxu0 0.0
    %133 = vmatpush1.msra.mxu0 %v115
    %134 = vmatprep.subr.mxu0 0.0
    %135 = vmatpush1.msra.mxu0 %v116
    %136 = vmatprep.subr.mxu0 0.0
    %137 = vmatpush1.msra.mxu0 %v117
    %138 = vmatprep.subr.mxu0 0.0
    %139 = vmatpush1.msra.mxu0 %v118
    %140 = vmatprep.subr.mxu0 0.0
    %141 = vmatpush1.msra.mxu0 0.0
    %142 = vmatprep.subr.mxu0 0.0
    %143 = vmatpush1.msra.mxu0 0.0
    %144 = vmatprep.subr.mxu0 0.0
    %145 = vmatpush1.msra.mxu0 0.0
    %146 = vmatprep.subr.mxu0 0.0
    %147 = vmatpush1.msra.mxu0 0.0
    %148 = vmatprep.subr.mxu0 0.0
    %149 = vmatpush1.msra.mxu0 0.0
    %150 = vmatprep.subr.mxu0 0.0
    %151 = vmatpush1.msra.mxu0 0.0
    %152 = vmatprep.subr.mxu0 0.0
    %153 = vmatpush1.msra.mxu0 0.0
    %154 = vmatprep.subr.mxu0 0.0
    %155 = vmatpush1.msra.mxu0 0.0
    %156 = vmatprep.subr.mxu0 0.0
    %157 = vmatpush1.msra.mxu0 0.0
    %158 = vmatprep.subr.mxu0 0.0
    %159 = vmatpush1.msra.mxu0 0.0
    %160 = vmatprep.subr.mxu0 0.0
    %161 = vmatpush1.msra.mxu0 0.0
    %162 = vmatprep.subr.mxu0 0.0
    %163 = vmatpush1.msra.mxu0 0.0
    %164 = vmatprep.subr.mxu0 0.0
    %165 = vmatpush1.msra.mxu0 0.0
    %166 = vmatprep.subr.mxu0 0.0
    %167 = vmatpush1.msra.mxu0 0.0
    %168 = vmatprep.subr.mxu0 0.0
    %169 = vmatpush1.msra.mxu0 0.0
    %170 = vmatprep.subr.mxu0 0.0
    %171 = vmatpush1.msra.mxu0 0.0
    %172 = vmatprep.subr.mxu0 0.0
    %173 = vmatpush1.msra.mxu0 0.0
    %174 = vmatprep.subr.mxu0 0.0
    %175 = vmatpush1.msra.mxu0 0.0
    %176 = vmatprep.subr.mxu0 0.0
    %177 = vmatpush1.msra.mxu0 0.0
    %178 = vmatprep.subr.mxu0 0.0
    %179 = vmatpush1.msra.mxu0 0.0
    %180 = vmatprep.subr.mxu0 0.0
    %181 = vmatpush1.msra.mxu0 0.0
    %182 = vmatprep.subr.mxu0 0.0
    %183 = vmatpush1.msra.mxu0 0.0
    %184 = vmatprep.subr.mxu0 0.0
    %185 = vmatpush1.msra.mxu0 0.0
    %186 = vmatprep.subr.mxu0 0.0
    %187 = vmatpush1.msra.mxu0 0.0
    %188 = vmatprep.subr.mxu0 0.0
    %189 = vmatpush1.msra.mxu0 0.0
    %190 = vmatprep.subr.mxu0 0.0
    %191 = vmatpush1.msra.mxu0 0.0
    %192 = vmatprep.subr.mxu0 0.0
    %193 = vmatpush1.msra.mxu0 0.0
    %194 = vmatprep.subr.mxu0 0.0
    %195 = vmatpush1.msra.mxu0 0.0
    %196 = vmatprep.mubr.f32.mxu0 0.0
    %197 = vmatmul.mubr.f32.gmra.mrb[0].mxu0 %v127
    %v198 = vpop.f32.mrb[0].mxu0
    %v199 = vadd.f32 %v124, %v198
    %v200 = vpop.f32.mrb[0].mxu0
    %201 = vmatprep.mubr.f32.mxu0 0.0
    %202 = vmatmul.mubr.f32.gmra.mrb[0].mxu0 %v130
    %v203 = vpop.f32.mrb[0].mxu0
    %v204 = vadd.f32 %v124, %v203
    %v205 = vpop.f32.mrb[0].mxu0
    %206 = vdwg.mxu0
    %v207 = vlaneseq
    %v208 = vand.u32 %v207, 127
    %v209 = vlaneseq
    %v210 = vshrl.u32 %v209, 7
    %v211 = vmul.u32 %v210, 32
    %vm212 = vcmp.ge.s32.totalorder %v208, %v211
    %v213 = vadd.s32 %v210, 1
    %v214 = vmul.u32 %v213, 32
    %vm215 = vcmp.lt.s32.totalorder %v208, %v214
    %vm216 = vmand %vm212, %vm215
    %v217 = vsel %vm216, 1, 0
    %v218 = vcvt.s32.f32 %v217
    %v221 = vunpack.c.l.s4 1966171168
    %v222 = vunpack.c.0.s8 %v221
    %v223 = vlaneseq
    %v224 = vshrl.u32 %v223, 7
    %v225 = vsub.s32 %v222, %v224
    %v226 = vrot.slane %v110, %v225
    %v227 = vcombine.high %v226, %v226
    %v229 = vunpack.c.l.s4 1966171168
    %v230 = vunpack.c.0.s8 %v229
    %v231 = vlaneseq
    %v232 = vshrl.u32 %v231, 7
    %v233 = vsub.s32 %v230, %v232
    %v234 = vrot.slane %v226, %v233
    %v236 = vunpack.c.l.s4 1966171168
    %v237 = vunpack.c.0.s8 %v236
    %v238 = vlaneseq
    %v239 = vshrl.u32 %v238, 7
    %v240 = vsub.s32 %v237, %v239
    %v241 = vrot.slane %v227, %v240
    %v242 = vlaneseq
    %v243 = vshrl.u32 %v242, 7
    %v244 = vsub.s32 0, %v243
    %v245 = vrot.slane %v234, %v244
    %v246 = vlaneseq
    %v247 = vshrl.u32 %v246, 7
    %v248 = vsub.s32 0, %v247
    %v249 = vrot.slane %v241, %v248
    %v252 = vmul.f32 %v245, %v218
    %v253 = vmul.f32 %v249, %v218
    %254 = vmatprep.subr.mxu0 0.0
    %255 = vmatpush1.xpose.msra.mxu0 %v199
    %256 = vmatprep.subr.mxu0 0.0
    %257 = vmatpush1.xpose.msra.mxu0 0.0
    %258 = vmatprep.subr.mxu0 0.0
    %259 = vmatpush1.xpose.msra.mxu0 0.0
    %260 = vmatprep.subr.mxu0 0.0
    %261 = vmatpush1.xpose.msra.mxu0 0.0
    %262 = vmatprep.subr.mxu0 0.0
    %263 = vmatpush1.xpose.msra.mxu0 0.0
    %264 = vmatprep.subr.mxu0 0.0
    %265 = vmatpush1.xpose.msra.mxu0 0.0
    %266 = vmatprep.subr.mxu0 0.0
    %267 = vmatpush1.xpose.msra.mxu0 0.0
    %268 = vmatprep.subr.mxu0 0.0
    %269 = vmatpush1.xpose.msra.mxu0 0.0
    %270 = vmatprep.subr.mxu0 0.0
    %271 = vmatpush1.xpose.msra.mxu0 0.0
    %272 = vmatprep.subr.mxu0 0.0
    %273 = vmatpush1.xpose.msra.mxu0 0.0
    %274 = vmatprep.subr.mxu0 0.0
    %275 = vmatpush1.xpose.msra.mxu0 0.0
    %276 = vmatprep.subr.mxu0 0.0
    %277 = vmatpush1.xpose.msra.mxu0 0.0
    %278 = vmatprep.subr.mxu0 0.0
    %279 = vmatpush1.xpose.msra.mxu0 0.0
    %280 = vmatprep.subr.mxu0 0.0
    %281 = vmatpush1.xpose.msra.mxu0 0.0
    %282 = vmatprep.subr.mxu0 0.0
    %283 = vmatpush1.xpose.msra.mxu0 0.0
    %284 = vmatprep.subr.mxu0 0.0
    %285 = vmatpush1.xpose.msra.mxu0 0.0
    %286 = vmatprep.subr.mxu0 0.0
    %287 = vmatpush1.xpose.msra.mxu0 0.0
    %288 = vmatprep.subr.mxu0 0.0
    %289 = vmatpush1.xpose.msra.mxu0 0.0
    %290 = vmatprep.subr.mxu0 0.0
    %291 = vmatpush1.xpose.msra.mxu0 0.0
    %292 = vmatprep.subr.mxu0 0.0
    %293 = vmatpush1.xpose.msra.mxu0 0.0
    %294 = vmatprep.subr.mxu0 0.0
    %295 = vmatpush1.xpose.msra.mxu0 0.0
    %296 = vmatprep.subr.mxu0 0.0
    %297 = vmatpush1.xpose.msra.mxu0 0.0
    %298 = vmatprep.subr.mxu0 0.0
    %299 = vmatpush1.xpose.msra.mxu0 0.0
    %300 = vmatprep.subr.mxu0 0.0
    %301 = vmatpush1.xpose.msra.mxu0 0.0
    %302 = vmatprep.subr.mxu0 0.0
    %303 = vmatpush1.xpose.msra.mxu0 0.0
    %304 = vmatprep.subr.mxu0 0.0
    %305 = vmatpush1.xpose.msra.mxu0 0.0
    %306 = vmatprep.subr.mxu0 0.0
    %307 = vmatpush1.xpose.msra.mxu0 0.0
    %308 = vmatprep.subr.mxu0 0.0
    %309 = vmatpush1.xpose.msra.mxu0 0.0
    %310 = vmatprep.subr.mxu0 0.0
    %311 = vmatpush1.xpose.msra.mxu0 0.0
    %312 = vmatprep.subr.mxu0 0.0
    %313 = vmatpush1.xpose.msra.mxu0 0.0
    %314 = vmatprep.subr.mxu0 0.0
    %315 = vmatpush1.xpose.msra.mxu0 0.0
    %316 = vmatprep.subr.mxu0 0.0
    %317 = vmatpush1.xpose.msra.mxu0 0.0
    %318 = vmatprep.mubr.f32.mxu0 0.0
    %319 = vmatmul.mubr.f32.gmra.mrb[0].mxu0 %v252
    %v320 = vpop.f32.mrb[0].mxu0
    %v321 = vadd.f32 0.0, %v320
    %v322 = vpop.f32.mrb[0].mxu0
    %323 = vdwg.mxu0
    %324 = vmatprep.subr.mxu0 0.0
    %325 = vmatpush1.xpose.msra.mxu0 %v204
    %326 = vmatprep.subr.mxu0 0.0
    %327 = vmatpush1.xpose.msra.mxu0 0.0
    %328 = vmatprep.subr.mxu0 0.0
    %329 = vmatpush1.xpose.msra.mxu0 0.0
    %330 = vmatprep.subr.mxu0 0.0
    %331 = vmatpush1.xpose.msra.mxu0 0.0
    %332 = vmatprep.subr.mxu0 0.0
    %333 = vmatpush1.xpose.msra.mxu0 0.0
    %334 = vmatprep.subr.mxu0 0.0
    %335 = vmatpush1.xpose.msra.mxu0 0.0
    %336 = vmatprep.subr.mxu0 0.0
    %337 = vmatpush1.xpose.msra.mxu0 0.0
    %338 = vmatprep.subr.mxu0 0.0
    %339 = vmatpush1.xpose.msra.mxu0 0.0
    %340 = vmatprep.subr.mxu0 0.0
    %341 = vmatpush1.xpose.msra.mxu0 0.0
    %342 = vmatprep.subr.mxu0 0.0
    %343 = vmatpush1.xpose.msra.mxu0 0.0
    %344 = vmatprep.subr.mxu0 0.0
    %345 = vmatpush1.xpose.msra.mxu0 0.0
    %346 = vmatprep.subr.mxu0 0.0
    %347 = vmatpush1.xpose.msra.mxu0 0.0
    %348 = vmatprep.subr.mxu0 0.0
    %349 = vmatpush1.xpose.msra.mxu0 0.0
    %350 = vmatprep.subr.mxu0 0.0
    %351 = vmatpush1.xpose.msra.mxu0 0.0
    %352 = vmatprep.subr.mxu0 0.0
    %353 = vmatpush1.xpose.msra.mxu0 0.0
    %354 = vmatprep.subr.mxu0 0.0
    %355 = vmatpush1.xpose.msra.mxu0 0.0
    %356 = vmatprep.subr.mxu0 0.0
    %357 = vmatpush1.xpose.msra.mxu0 0.0
    %358 = vmatprep.subr.mxu0 0.0
    %359 = vmatpush1.xpose.msra.mxu0 0.0
    %360 = vmatprep.subr.mxu0 0.0
    %361 = vmatpush1.xpose.msra.mxu0 0.0
    %362 = vmatprep.subr.mxu0 0.0
    %363 = vmatpush1.xpose.msra.mxu0 0.0
    %364 = vmatprep.subr.mxu0 0.0
    %365 = vmatpush1.xpose.msra.mxu0 0.0
    %366 = vmatprep.subr.mxu0 0.0
    %367 = vmatpush1.xpose.msra.mxu0 0.0
    %368 = vmatprep.subr.mxu0 0.0
    %369 = vmatpush1.xpose.msra.mxu0 0.0
    %370 = vmatprep.subr.mxu0 0.0
    %371 = vmatpush1.xpose.msra.mxu0 0.0
    %372 = vmatprep.subr.mxu0 0.0
    %373 = vmatpush1.xpose.msra.mxu0 0.0
    %374 = vmatprep.subr.mxu0 0.0
    %375 = vmatpush1.xpose.msra.mxu0 0.0
    %376 = vmatprep.subr.mxu0 0.0
    %377 = vmatpush1.xpose.msra.mxu0 0.0
    %378 = vmatprep.subr.mxu0 0.0
    %379 = vmatpush1.xpose.msra.mxu0 0.0
    %380 = vmatprep.subr.mxu0 0.0
    %381 = vmatpush1.xpose.msra.mxu0 0.0
    %382 = vmatprep.subr.mxu0 0.0
    %383 = vmatpush1.xpose.msra.mxu0 0.0
    %384 = vmatprep.subr.mxu0 0.0
    %385 = vmatpush1.xpose.msra.mxu0 0.0
    %386 = vmatprep.subr.mxu0 0.0
    %387 = vmatpush1.xpose.msra.mxu0 0.0
    %388 = vmatprep.mubr.f32.mxu0 0.0
    %389 = vmatmul.mubr.f32.gmra.mrb[0].mxu0 %v253
    %v390 = vpop.f32.mrb[0].mxu0
    %v391 = vadd.f32 0.0, %v390
    %v392 = vpop.f32.mrb[0].mxu0
    %393 = vdwg.mxu0
    %v394 = vmul.f32 %v321, 0.17677669
    %v395 = vmul.f32 %v391, 0.17677669
    %vm396 = vcmask 58368
    %v397 = vsel %vm396, %v394, -inf
    %398 = vmax.xlane.f32.xlu0 %v397
    %v399 = vpop.xlane.xlu0 %398
    %v400 = vsel %vm396, %v395, -inf
    %401 = vmax.xlane.f32.xlu0 %v400
    %v402 = vpop.xlane.xlu0 %401
    %v403 = vsub.f32 %v394, %v399
    %v404 = vsub.f32 %v395, %v402
    %v405 = vmul.f32 %v403, 1.442695
    %v406 = vpow.pop %v405
    %v407 = vmul.f32 %v404, 1.442695
    %v408 = vpow.pop %v407
    %v409 = vsel %vm396, %v406, 0.0
    %410 = vadd.xlane.f32.xlu0 %v409
    %v411 = vpop.xlane.xlu0 %410
    %v412 = vsel %vm396, %v408, 0.0
    %413 = vadd.xlane.f32.xlu0 %v412
    %v414 = vpop.xlane.xlu0 %413
    %v415 = vrcp.pop %v411
    %v416 = vrcp.pop %v414
    %v417 = vmul.f32 %v411, %v415
    %v418 = vmul.f32 %v414, %v416
    %v419 = vsub.f32 2.0, %v417
    %v420 = vsub.f32 2.0, %v418
    %v421 = vmul.f32 %v415, %v419
    %v422 = vmul.f32 %v416, %v420
    %v423 = vmul.f32 %v406, %v421
    %v424 = vmul.f32 %v408, %v422
    %v425 = vld [vmem:[%s2] sm:$0xff]
    %v426 = vld [vmem:[%s2 + $0x8] sm:$0xff]
    %vm427 = vcmask 64512
    %v429 = vsel %vm427, %v423, 0
    %431 = vmatprep.subr.mxu0 0.0
    %432 = vmatpush1.msra.mxu0 %v425
    %433 = vmatprep.subr.mxu0 0.0
    %434 = vmatpush1.msra.mxu0 0.0
    %435 = vmatprep.subr.mxu0 0.0
    %436 = vmatpush1.msra.mxu0 0.0
    %437 = vmatprep.subr.mxu0 0.0
    %438 = vmatpush1.msra.mxu0 0.0
    %439 = vmatprep.subr.mxu0 0.0
    %440 = vmatpush1.msra.mxu0 0.0
    %441 = vmatprep.subr.mxu0 0.0
    %442 = vmatpush1.msra.mxu0 0.0
    %443 = vmatprep.subr.mxu0 0.0
    %444 = vmatpush1.msra.mxu0 0.0
    %445 = vmatprep.subr.mxu0 0.0
    %446 = vmatpush1.msra.mxu0 0.0
    %447 = vmatprep.subr.mxu0 0.0
    %448 = vmatpush1.msra.mxu0 0.0
    %449 = vmatprep.subr.mxu0 0.0
    %450 = vmatpush1.msra.mxu0 0.0
    %451 = vmatprep.subr.mxu0 0.0
    %452 = vmatpush1.msra.mxu0 0.0
    %453 = vmatprep.subr.mxu0 0.0
    %454 = vmatpush1.msra.mxu0 0.0
    %455 = vmatprep.subr.mxu0 0.0
    %456 = vmatpush1.msra.mxu0 0.0
    %457 = vmatprep.subr.mxu0 0.0
    %458 = vmatpush1.msra.mxu0 0.0
    %459 = vmatprep.subr.mxu0 0.0
    %460 = vmatpush1.msra.mxu0 0.0
    %461 = vmatprep.subr.mxu0 0.0
    %462 = vmatpush1.msra.mxu0 0.0
    %463 = vmatprep.subr.mxu0 0.0
    %464 = vmatpush1.msra.mxu0 0.0
    %465 = vmatprep.subr.mxu0 0.0
    %466 = vmatpush1.msra.mxu0 0.0
    %467 = vmatprep.subr.mxu0 0.0
    %468 = vmatpush1.msra.mxu0 0.0
    %469 = vmatprep.subr.mxu0 0.0
    %470 = vmatpush1.msra.mxu0 0.0
    %471 = vmatprep.subr.mxu0 0.0
    %472 = vmatpush1.msra.mxu0 0.0
    %473 = vmatprep.subr.mxu0 0.0
    %474 = vmatpush1.msra.mxu0 0.0
    %475 = vmatprep.subr.mxu0 0.0
    %476 = vmatpush1.msra.mxu0 0.0
    %477 = vmatprep.subr.mxu0 0.0
    %478 = vmatpush1.msra.mxu0 0.0
    %479 = vmatprep.subr.mxu0 0.0
    %480 = vmatpush1.msra.mxu0 0.0
    %481 = vmatprep.subr.mxu0 0.0
    %482 = vmatpush1.msra.mxu0 0.0
    %483 = vmatprep.subr.mxu0 0.0
    %484 = vmatpush1.msra.mxu0 0.0
    %485 = vmatprep.subr.mxu0 0.0
    %486 = vmatpush1.msra.mxu0 0.0
    %487 = vmatprep.subr.mxu0 0.0
    %488 = vmatpush1.msra.mxu0 0.0
    %489 = vmatprep.subr.mxu0 0.0
    %490 = vmatpush1.msra.mxu0 0.0
    %491 = vmatprep.subr.mxu0 0.0
    %492 = vmatpush1.msra.mxu0 0.0
    %493 = vmatprep.subr.mxu0 0.0
    %494 = vmatpush1.msra.mxu0 0.0
    %495 = vmatprep.mubr.f32.mxu0 0.0
    %496 = vmatmul.mubr.f32.gmra.mrb[0].mxu0 %v429
    %v497 = vpop.f32.mrb[0].mxu0
    %v498 = vadd.f32 0.0, %v497
    %v499 = vpop.f32.mrb[0].mxu0
    %500 = vdwg.mxu0
    %v502 = vsel %vm427, %v424, 0
    %504 = vmatprep.subr.mxu0 0.0
    %505 = vmatpush1.msra.mxu0 %v426
    %506 = vmatprep.subr.mxu0 0.0
    %507 = vmatpush1.msra.mxu0 0.0
    %508 = vmatprep.subr.mxu0 0.0
    %509 = vmatpush1.msra.mxu0 0.0
    %510 = vmatprep.subr.mxu0 0.0
    %511 = vmatpush1.msra.mxu0 0.0
    %512 = vmatprep.subr.mxu0 0.0
    %513 = vmatpush1.msra.mxu0 0.0
    %514 = vmatprep.subr.mxu0 0.0
    %515 = vmatpush1.msra.mxu0 0.0
    %516 = vmatprep.subr.mxu0 0.0
    %517 = vmatpush1.msra.mxu0 0.0
    %518 = vmatprep.subr.mxu0 0.0
    %519 = vmatpush1.msra.mxu0 0.0
    %520 = vmatprep.subr.mxu0 0.0
    %521 = vmatpush1.msra.mxu0 0.0
    %522 = vmatprep.subr.mxu0 0.0
    %523 = vmatpush1.msra.mxu0 0.0
    %524 = vmatprep.subr.mxu0 0.0
    %525 = vmatpush1.msra.mxu0 0.0
    %526 = vmatprep.subr.mxu0 0.0
    %527 = vmatpush1.msra.mxu0 0.0
    %528 = vmatprep.subr.mxu0 0.0
    %529 = vmatpush1.msra.mxu0 0.0
    %530 = vmatprep.subr.mxu0 0.0
    %531 = vmatpush1.msra.mxu0 0.0
    %532 = vmatprep.subr.mxu0 0.0
    %533 = vmatpush1.msra.mxu0 0.0
    %534 = vmatprep.subr.mxu0 0.0
    %535 = vmatpush1.msra.mxu0 0.0
    %536 = vmatprep.subr.mxu0 0.0
    %537 = vmatpush1.msra.mxu0 0.0
    %538 = vmatprep.subr.mxu0 0.0
    %539 = vmatpush1.msra.mxu0 0.0
    %540 = vmatprep.subr.mxu0 0.0
    %541 = vmatpush1.msra.mxu0 0.0
    %542 = vmatprep.subr.mxu0 0.0
    %543 = vmatpush1.msra.mxu0 0.0
    %544 = vmatprep.subr.mxu0 0.0
    %545 = vmatpush1.msra.mxu0 0.0
    %546 = vmatprep.subr.mxu0 0.0
    %547 = vmatpush1.msra.mxu0 0.0
    %548 = vmatprep.subr.mxu0 0.0
    %549 = vmatpush1.msra.mxu0 0.0
    %550 = vmatprep.subr.mxu0 0.0
    %551 = vmatpush1.msra.mxu0 0.0
    %552 = vmatprep.subr.mxu0 0.0
    %553 = vmatpush1.msra.mxu0 0.0
    %554 = vmatprep.subr.mxu0 0.0
    %555 = vmatpush1.msra.mxu0 0.0
    %556 = vmatprep.subr.mxu0 0.0
    %557 = vmatpush1.msra.mxu0 0.0
    %558 = vmatprep.subr.mxu0 0.0
    %559 = vmatpush1.msra.mxu0 0.0
    %560 = vmatprep.subr.mxu0 0.0
    %561 = vmatpush1.msra.mxu0 0.0
    %562 = vmatprep.subr.mxu0 0.0
    %563 = vmatpush1.msra.mxu0 0.0
    %564 = vmatprep.subr.mxu0 0.0
    %565 = vmatpush1.msra.mxu0 0.0
    %566 = vmatprep.subr.mxu0 0.0
    %567 = vmatpush1.msra.mxu0 0.0
    %568 = vmatprep.mubr.f32.mxu0 0.0
    %569 = vmatmul.mubr.f32.gmra.mrb[0].mxu0 %v502
    %v570 = vpop.f32.mrb[0].mxu0
    %v571 = vadd.f32 0.0, %v570
    %v572 = vpop.f32.mrb[0].mxu0
    %573 = vdwg.mxu0
    %v576 = vrot.slane %v571, 7
    %vm577 = vcmask 1041409
    %v578 = vsel %vm577, %v576, %v498
    %v580 = vrot.slane %v498, 1
    %v581 = vsel %vm577, %v571, %v580
    %582 = vrot.lane.b32.xlu0 %v581, 16
    %v583 = vpop.permute.xlu0 %582
    %vm585 = vcmask 130048
    %v586 = vsel %vm585, %v578, %v583
    %v587 = vsel %vm39, %v586, 0.0
    %588 = vst [vmem:[#allocation2] sm:$0x3] %v587
    // Predicated region
    $region30: #{attention_forward.1} parent=1 // pred_check
      _
    $region31: #{attention_forward.1} parent=1 // pred_check_branch
      %590 = sbr.rel (0) target = $region33
    $region32: #{attention_forward.1} parent=1 // pred_region
      %s592 = ssub.s32 32, 32
      %593 = vsyncadd [#allocation3], %s592
      %s595 = sshll.u32 [#allocation2], 4
      %s596 = int_to_ptr.vmem [resolvable:$true] %s595
      %598 = dma.vmem_to_hbm [thread:$0]  %s596, 32, %s7, [#allocation3]
    $region33: #{attention_forward.1} parent=1 // pred_fallthru
      _
    // Predicated region
    $region34: #{attention_forward.1} parent=1 // pred_check
      _
    $region35: #{attention_forward.1} parent=1 // pred_check_branch
      %600 = sbr.rel (0) target = $region37
    $region36: #{attention_forward.1} parent=1 // pred_region
      %601 = dma.done [#allocation3], 32
    $region37: #{attention_forward.1} parent=1 // pred_fallthru
      _
    %602 = vsyncpa [#allocation3], 1

</llo_original>
